<compile_context>
chip_gen: v5e
topology: v5e:2x2
jax: 0.10.0
libtpu: 0.0.40
codegen_flags: <defaults>
</compile_context>

<pallas_src>
import jax
import jax.numpy as jnp
from jax.experimental import pallas as pl
from jax.experimental.pallas import tpu as pltpu


def _round_up(x, m):
    return ((x + m - 1) // m) * m


def _patch_embed_kernel(x_ref, w_ref, b_ref, o_ref):
    # One MXU matmul per (M-tile, D-tile); accumulate in f32, bias in epilogue.
    acc = jnp.dot(x_ref[...], w_ref[...], preferred_element_type=jnp.float32)
    o_ref[...] = (acc + b_ref[...]).astype(o_ref.dtype)


def _working_set_bytes(tm, tn, k, itemsize):
    # Double-buffered x / out tiles + double-buffered weight tile + bias.
    return 2 * tm * k * itemsize + 2 * tm * tn * itemsize + 2 * k * tn * itemsize + 2 * tn * 4


def patch_embed(x, weight, bias, patch_size, *, tile_m=1024, tile_n=1024):
    """Pallas PatchEmbed forward.

    Args:
      x:      (B, C, H, W) float, NCHW like the PyTorch module.
      weight: (D, C, p, p) Conv2d weight.
      bias:   (D,)         Conv2d bias.
      patch_size: int p, with H % p == 0 and W % p == 0.
      tile_m: max rows (patches) per grid step; rounded to a multiple of 8.
      tile_n: max output features per grid step; rounded to a multiple of 128.

    Returns:
      (B, N, D) with N = (H // p) * (W // p).
    """
    B, C, H, W = x.shape
    D = weight.shape[0]
    p = patch_size
    assert H % p == 0 and W % p == 0
    hp, wp = H // p, W // p
    N = hp * wp
    K = C * p * p
    M = B * N

    # --- glue: extract non-overlapping patches (reshape/transpose only) ---
    # (B, C, H, W) -> (B, C, hp, p, wp, p) -> (B, hp, wp, C, p, p) -> (M, K)
    x_patches = x.reshape(B, C, hp, p, wp, p)
    x_patches = x_patches.transpose(0, 2, 4, 1, 3, 5).reshape(M, K)

    # Conv weight (D, C, p, p) -> (K, D); bias -> f32 (1, D) once, up front.
    w2d = weight.reshape(D, K).T
    b2d = bias.astype(jnp.float32).reshape(1, D)

    itemsize = jnp.dtype(x.dtype).itemsize

    # --- pad to TPU-friendly extents (lane-dense output, full MXU tiles) ---
    K_pad = _round_up(K, 128)
    D_pad = _round_up(D, 128)

    # D tiling: keep the whole (padded) weight resident if it fits one tile.
    tn_max = max(128, _round_up(min(tile_n, D_pad), 128))
    if D_pad <= tn_max:
        tn = D_pad
    else:
        tn = tn_max
        D_pad = _round_up(D_pad, tn)

    # M tiling: biggest tile that fits the VMEM budget (shrink by halving).
    vmem_budget = 44 * 1024 * 1024
    tm = min(_round_up(max(tile_m, 8), 8), _round_up(M, 8))
    while tm > 8 and _working_set_bytes(tm, tn, K_pad, itemsize) > vmem_budget:
        tm = _round_up(tm // 2, 8)
    while tn > 128 and _working_set_bytes(tm, tn, K_pad, itemsize) > vmem_budget:
        tn = _round_up(tn // 2, 128)
        D_pad = _round_up(D_pad, tn)
    M_pad = _round_up(M, tm)

    if K_pad != K:
        x_patches = jnp.pad(x_patches, ((0, 0), (0, K_pad - K)))
        w2d = jnp.pad(w2d, ((0, K_pad - K), (0, 0)))
    if D_pad != D:
        w2d = jnp.pad(w2d, ((0, 0), (0, D_pad - D)))
        b2d = jnp.pad(b2d, ((0, 0), (0, D_pad - D)))
    if M_pad != M:
        x_patches = jnp.pad(x_patches, ((0, M_pad - M), (0, 0)))

    vmem_bytes = int(
        min(_working_set_bytes(tm, tn, K_pad, itemsize) + (4 << 20),
            64 * 1024 * 1024)
    )

    grid = (M_pad // tm, D_pad // tn)

    out2d = pl.pallas_call(
        _patch_embed_kernel,
        out_shape=jax.ShapeDtypeStruct((M_pad, D_pad), x.dtype),
        grid_spec=pltpu.PrefetchScalarGridSpec(
            num_scalar_prefetch=0,
            grid=grid,
            in_specs=[
                pl.BlockSpec((tm, K_pad), lambda i, j: (i, 0)),   # rows (per i)
                pl.BlockSpec((K_pad, tn), lambda i, j: (0, j)),   # weight cols
                pl.BlockSpec((1, tn), lambda i, j: (0, j)),       # bias cols
            ],
            out_specs=pl.BlockSpec((tm, tn), lambda i, j: (i, j)),
        ),
        compiler_params=pltpu.CompilerParams(
            dimension_semantics=("parallel", "parallel"),
            vmem_limit_bytes=vmem_bytes,
        ),
        cost_estimate=pl.CostEstimate(
            flops=2 * M_pad * K_pad * D_pad,
            transcendentals=0,
            bytes_accessed=(M_pad * K_pad + K_pad * D_pad + M_pad * D_pad)
            * itemsize,
        ),
    )(x_patches, w2d, b2d)

    # Slice padding off and restore (B, N, D).
    return out2d[:M, :D].reshape(B, N, D)


def _reference(x, weight, bias, patch_size):
    """Pure-JAX reference: conv via lax.conv_general_dilated, NCHW."""
    y = jax.lax.conv_general_dilated(
        x, weight,
        window_strides=(patch_size, patch_size),
        padding="VALID",
        dimension_numbers=("NCHW", "OIHW", "NCHW"),
    ) + bias.reshape(1, -1, 1, 1)
    B, D, hp, wp = y.shape
    return y.reshape(B, D, hp * wp).transpose(0, 2, 1)


if __name__ == "__main__":
    key = jax.random.PRNGKey(0)

    # --- small shapes consistent with the module's forward ---
    B, C, H, W = 2, 4, 16, 16
    patch_size = 8
    embed_dim = 32

    kx, kw, kb = jax.random.split(key, 3)
    x = jax.random.normal(kx, (B, C, H, W), dtype=jnp.float32)
    weight = jax.random.normal(
        kw, (embed_dim, C, patch_size, patch_size), dtype=jnp.float32) * 0.02
    bias = jax.random.normal(kb, (embed_dim,), dtype=jnp.float32) * 0.02

    out = patch_embed(x, weight, bias, patch_size)
    out = jax.block_until_ready(out)
    ref = _reference(x, weight, bias, patch_size)
    assert out.shape == (B, (H // patch_size) * (W // patch_size), embed_dim)
    assert jnp.allclose(out, ref, atol=1e-4, rtol=1e-4)

    # --- second check: grid over M > 1, M/D padding paths ---
    B2, C2, H2, W2 = 2, 4, 64, 64      # M = 2 * 64 = 128 patches
    kx2, kw2, kb2 = jax.random.split(jax.random.PRNGKey(1), 3)
    x2 = jax.random.normal(kx2, (B2, C2, H2, W2), dtype=jnp.float32)
    w2 = jax.random.normal(
        kw2, (embed_dim, C2, patch_size, patch_size), dtype=jnp.float32) * 0.02
    b2 = jax.random.normal(kb2, (embed_dim,), dtype=jnp.float32) * 0.02

    out2 = patch_embed(x2, w2, b2, patch_size, tile_m=64)    # grid = (2, 1)
    out2 = jax.block_until_ready(out2)
    ref2 = _reference(x2, w2, b2, patch_size)
    assert out2.shape == (B2, (H2 // patch_size) * (W2 // patch_size), embed_dim)
    assert jnp.allclose(out2, ref2, atol=1e-4, rtol=1e-4)

    # --- third check: grid over D > 1 (D tiling path), still small ---
    embed_dim3 = 256
    kx3, kw3, kb3 = jax.random.split(jax.random.PRNGKey(2), 3)
    x3 = jax.random.normal(kx3, (B2, C2, H2, W2), dtype=jnp.float32)
    w3 = jax.random.normal(
        kw3, (embed_dim3, C2, patch_size, patch_size), dtype=jnp.float32) * 0.02
    b3 = jax.random.normal(kb3, (embed_dim3,), dtype=jnp.float32) * 0.02

    out3 = patch_embed(x3, w3, b3, patch_size, tile_m=64, tile_n=128)  # grid=(2,2)
    out3 = jax.block_until_ready(out3)
    ref3 = _reference(x3, w3, b3, patch_size)
    assert out3.shape == (B2, (H2 // patch_size) * (W2 // patch_size), embed_dim3)
    assert jnp.allclose(out3, ref3, atol=1e-4, rtol=1e-4)

    print("KERNEL_OK")
</pallas_src>

<mosaic_0001>
module attributes {stable_mosaic.version = 11 : i64} {
  func.func @_patch_embed_kernel(%arg0: i32, %arg1: i32, %arg2: memref<8x256xf32, #tpu.memory_space<vmem>>, %arg3: memref<256x128xf32, #tpu.memory_space<vmem>>, %arg4: memref<1x128xf32, #tpu.memory_space<vmem>>, %arg5: memref<8x128xf32, #tpu.memory_space<vmem>>) attributes {dimension_semantics = [#tpu.dimension_semantics<parallel>, #tpu.dimension_semantics<parallel>], iteration_bounds = array<i64: 1, 1>, scalar_prefetch = 0 : i64, scratch_operands = 0 : i64, tpu.core_type = #tpu.core_type<tc>, window_params = [{transform_indices = @transform_0, window_bounds = array<i64: 8, 256>}, {transform_indices = @transform_1, window_bounds = array<i64: 256, 128>}, {transform_indices = @transform_2, window_bounds = array<i64: 1, 128>}, {transform_indices = @transform_3, window_bounds = array<i64: 8, 128>}]} {
    %c0 = arith.constant 0 : index
    %c0_0 = arith.constant 0 : index
    %0 = vector.load %arg2[%c0, %c0_0] : memref<8x256xf32, #tpu.memory_space<vmem>>, vector<8x256xf32>
    %c0_1 = arith.constant 0 : index
    %c0_2 = arith.constant 0 : index
    %1 = vector.load %arg3[%c0_1, %c0_2] : memref<256x128xf32, #tpu.memory_space<vmem>>, vector<256x128xf32>
    %cst = arith.constant dense<0.000000e+00> : vector<8x128xf32>
    %2 = tpu.matmul %0, %1, %cst {dimension_numbers = #tpu.dot_dimension_numbers<[1], [0], [0], [1], [0, 0, 1, 1], [], []>} : vector<8x256xf32>, vector<256x128xf32>, vector<8x128xf32> -> vector<8x128xf32>
    %c0_3 = arith.constant 0 : index
    %c0_4 = arith.constant 0 : index
    %3 = vector.load %arg4[%c0_3, %c0_4] : memref<1x128xf32, #tpu.memory_space<vmem>>, vector<1x128xf32>
    %4 = vector.broadcast %3 : vector<1x128xf32> to vector<8x128xf32>
    %5 = arith.addf %2, %4 : vector<8x128xf32>
    %c0_5 = arith.constant 0 : index
    %c0_6 = arith.constant 0 : index
    %6 = vector.load %arg5[%c0_5, %c0_6] : memref<8x128xf32, #tpu.memory_space<vmem>>, vector<8x128xf32>
    tpu.vector_store %arg5[%c0_5, %c0_6], %5 {strides = array<i32>} : memref<8x128xf32, #tpu.memory_space<vmem>>, vector<8x128xf32>,
    return
  }
  func.func @transform_0(%arg0: i32, %arg1: i32) -> (i32, i32) {
    %c0_i32 = arith.constant 0 : i32
    %c0_i32_0 = arith.constant 0 : i32
    return %arg0, %c0_i32 : i32, i32
  }
  func.func @transform_1(%arg0: i32, %arg1: i32) -> (i32, i32) {
    %c0_i32 = arith.constant 0 : i32
    %c0_i32_0 = arith.constant 0 : i32
    return %c0_i32, %arg1 : i32, i32
  }
  func.func @transform_2(%arg0: i32, %arg1: i32) -> (i32, i32) {
    %c0_i32 = arith.constant 0 : i32
    %c0_i32_0 = arith.constant 0 : i32
    return %c0_i32, %arg1 : i32, i32
  }
  func.func @transform_3(%arg0: i32, %arg1: i32) -> (i32, i32) {
    %c0_i32 = arith.constant 0 : i32
    return %arg0, %arg1 : i32, i32
  }
}

</mosaic_0001>

<llo_original>
// kernel: tpu_custom_call.1
$region0: #{tpu_custom_call.1}
  #allocation0 [shape = 'u32[]', space=smem, size = 0x4, offset = 0x4, fixed_abs, tag = 'smem constant byte address 0x4 - core index']
  #allocation1 [shape = 'u32[72,128]{1,0:T(1,128)}', space=vmem, size = 0x9000, scoped, tag = 'internal scratch']
  %s0 = inlined_call_operand.hbm [shape: f32[8,256], index: 0, kind: input, shape index: {}]
  %s1 = inlined_call_operand.hbm [shape: f32[256,128], index: 1, kind: input, shape index: {}]
  %s2 = inlined_call_operand.vmem [shape: f32[1,128], index: 2, kind: input, shape index: {}]
  %s3 = inlined_call_operand.hbm [shape: f32[8,128], index: 3, kind: output, shape index: {}]
  %s4 = sld [smem:[#allocation0]]
  $region30: #{tpu_custom_call.1} parent=0
    _
  %s6 = ssub.s32 1, %s4
  %s7 = scalar_select 0, %s6, %s4
  $region1: #{tpu_custom_call.1} parent=0
    #allocation2 [shape = 'u8[8192]{0}', space=vmem, size = 0x2000, scoped, tag = 'input window, operand 0, single buffered']
    #allocation3 [shape = 's32[1]{0}', space=sflag, size = 0x4, scoped, tag = 'scoped memory for tpu_custom_call.1']
    #allocation4 [shape = 's32[1]{0}', space=sflag, size = 0x4, scoped, tag = 'scoped memory for tpu_custom_call.1']
    #allocation5 [shape = 'u8[131072]{0}', space=vmem, size = 0x20000, scoped, tag = 'input window, operand 1, single buffered']
    #allocation6 [shape = 's32[1]{0}', space=sflag, size = 0x4, scoped, tag = 'scoped memory for tpu_custom_call.1']
    #allocation7 [shape = 'u8[4096]{0}', space=vmem, size = 0x1000, scoped, tag = 'output window, operand 0, single buffered']
    %8 = vsyncpa [#allocation3], 0
    %9 = vsyncpa [#allocation6], 0
    %10 = vsyncpa [#allocation4], 0
    // Predicated region
    $region2: #{tpu_custom_call.1} parent=1 // pred_check
      _
    $region3: #{tpu_custom_call.1} parent=1 // pred_check_branch
      %12 = sbr.rel (0) target = $region5
    $region4: #{tpu_custom_call.1} parent=1 // pred_region
      %14 = vsyncadd [#allocation3], 0
      %s16 = sshll.u32 %s0, 4
      %s17 = int_to_ptr.hbm [resolvable:$true] %s16
      %s18 = sshll.u32 [#allocation2], 4
      %s19 = int_to_ptr.vmem [resolvable:$true] %s18
      %21 = dma.hbm_to_vmem [thread:$0]  %s17, 256, %s19, [#allocation3]
    $region5: #{tpu_custom_call.1} parent=1 // pred_fallthru
      _
    // Predicated region
    $region6: #{tpu_custom_call.1} parent=1 // pred_check
      _
    $region7: #{tpu_custom_call.1} parent=1 // pred_check_branch
      %23 = sbr.rel (0) target = $region9
    $region8: #{tpu_custom_call.1} parent=1 // pred_region
      %25 = vsyncadd [#allocation6], 0
      %s26 = sshll.u32 %s1, 4
      %s27 = int_to_ptr.hbm [resolvable:$true] %s26
      %s28 = sshll.u32 [#allocation5], 4
      %s29 = int_to_ptr.vmem [resolvable:$true] %s28
      %34 = dma.hbm_to_vmem [thread:$0]  %s27, 4096, %s29, [#allocation6], 128, 128, 8
    $region9: #{tpu_custom_call.1} parent=1 // pred_fallthru
      _
    // Predicated region
    $region10: #{tpu_custom_call.1} parent=1 // pred_check
      _
    $region11: #{tpu_custom_call.1} parent=1 // pred_check_branch
      %36 = sbr.rel (0) target = $region13
    $region12: #{tpu_custom_call.1} parent=1 // pred_region
      _
    $region13: #{tpu_custom_call.1} parent=1 // pred_fallthru
      _
    // Predicated region
    $region14: #{tpu_custom_call.1} parent=1 // pred_check
      _
    $region15: #{tpu_custom_call.1} parent=1 // pred_check_branch
      %38 = sbr.rel (0) target = $region17
    $region16: #{tpu_custom_call.1} parent=1 // pred_region
      %40 = dma.done [#allocation3], 256
    $region17: #{tpu_custom_call.1} parent=1 // pred_fallthru
      _
    // Predicated region
    $region18: #{tpu_custom_call.1} parent=1 // pred_check
      _
    $region19: #{tpu_custom_call.1} parent=1 // pred_check_branch
      %42 = sbr.rel (0) target = $region21
    $region20: #{tpu_custom_call.1} parent=1 // pred_region
      %44 = dma.done [#allocation6], 4096
    $region21: #{tpu_custom_call.1} parent=1 // pred_fallthru
      _
    %v45 = vld [vmem:[#allocation2] sm:$0xff]
    %v46 = vld [vmem:[#allocation2 + $0x8] sm:$0xff]
    %v47 = vld [vmem:[#allocation5] sm:$0xff]
    %v48 = vld [vmem:[#allocation5 + $0x8] sm:$0xff]
    %v49 = vld [vmem:[#allocation5 + $0x10] sm:$0xff]
    %v50 = vld [vmem:[#allocation5 + $0x18] sm:$0xff]
    %v51 = vld [vmem:[#allocation5 + $0x20] sm:$0xff]
    %v52 = vld [vmem:[#allocation5 + $0x28] sm:$0xff]
    %v53 = vld [vmem:[#allocation5 + $0x30] sm:$0xff]
    %v54 = vld [vmem:[#allocation5 + $0x38] sm:$0xff]
    %v55 = vld [vmem:[#allocation5 + $0x40] sm:$0xff]
    %v56 = vld [vmem:[#allocation5 + $0x48] sm:$0xff]
    %v57 = vld [vmem:[#allocation5 + $0x50] sm:$0xff]
    %v58 = vld [vmem:[#allocation5 + $0x58] sm:$0xff]
    %v59 = vld [vmem:[#allocation5 + $0x60] sm:$0xff]
    %v60 = vld [vmem:[#allocation5 + $0x68] sm:$0xff]
    %v61 = vld [vmem:[#allocation5 + $0x70] sm:$0xff]
    %v62 = vld [vmem:[#allocation5 + $0x78] sm:$0xff]
    %v63 = vld [vmem:[#allocation5 + $0x80] sm:$0xff]
    %v64 = vld [vmem:[#allocation5 + $0x88] sm:$0xff]
    %v65 = vld [vmem:[#allocation5 + $0x90] sm:$0xff]
    %v66 = vld [vmem:[#allocation5 + $0x98] sm:$0xff]
    %v67 = vld [vmem:[#allocation5 + $0xa0] sm:$0xff]
    %v68 = vld [vmem:[#allocation5 + $0xa8] sm:$0xff]
    %v69 = vld [vmem:[#allocation5 + $0xb0] sm:$0xff]
    %v70 = vld [vmem:[#allocation5 + $0xb8] sm:$0xff]
    %v71 = vld [vmem:[#allocation5 + $0xc0] sm:$0xff]
    %v72 = vld [vmem:[#allocation5 + $0xc8] sm:$0xff]
    %v73 = vld [vmem:[#allocation5 + $0xd0] sm:$0xff]
    %v74 = vld [vmem:[#allocation5 + $0xd8] sm:$0xff]
    %v75 = vld [vmem:[#allocation5 + $0xe0] sm:$0xff]
    %v76 = vld [vmem:[#allocation5 + $0xe8] sm:$0xff]
    %v77 = vld [vmem:[#allocation5 + $0xf0] sm:$0xff]
    %v78 = vld [vmem:[#allocation5 + $0xf8] sm:$0xff]
    %v79 = vld [vmem:[%s2] sm:$0x1]
    %v81 = vperm.slane %v79, 0
    %83 = vmatpush.msra.mxu0 %v62
    %84 = vmatpush.msra.mxu0 %v61
    %85 = vmatpush.msra.mxu0 %v60
    %86 = vmatpush.msra.mxu0 %v59
    %87 = vmatpush.msra.mxu0 %v58
    %88 = vmatpush.msra.mxu0 %v57
    %89 = vmatpush.msra.mxu0 %v56
    %90 = vmatpush.msra.mxu0 %v55
    %91 = vmatpush.msra.mxu0 %v54
    %92 = vmatpush.msra.mxu0 %v53
    %93 = vmatpush.msra.mxu0 %v52
    %94 = vmatpush.msra.mxu0 %v51
    %95 = vmatpush.msra.mxu0 %v50
    %96 = vmatpush.msra.mxu0 %v49
    %97 = vmatpush.msra.mxu0 %v48
    %98 = vmatpush.msra.mxu0 %v47
    %99 = vmatmul.f32.gmra.mxu0 %v45
    %v100 = vpop.f32.mrf.mxu0
    %v101 = vadd.f32 %v81, %v100
    %102 = vdwg.mxu0
    %103 = vmatpush.msra.mxu0 %v78
    %104 = vmatpush.msra.mxu0 %v77
    %105 = vmatpush.msra.mxu0 %v76
    %106 = vmatpush.msra.mxu0 %v75
    %107 = vmatpush.msra.mxu0 %v74
    %108 = vmatpush.msra.mxu0 %v73
    %109 = vmatpush.msra.mxu0 %v72
    %110 = vmatpush.msra.mxu0 %v71
    %111 = vmatpush.msra.mxu0 %v70
    %112 = vmatpush.msra.mxu0 %v69
    %113 = vmatpush.msra.mxu0 %v68
    %114 = vmatpush.msra.mxu0 %v67
    %115 = vmatpush.msra.mxu0 %v66
    %116 = vmatpush.msra.mxu0 %v65
    %117 = vmatpush.msra.mxu0 %v64
    %118 = vmatpush.msra.mxu0 %v63
    %119 = vmatmul.f32.gmra.mxu0 %v46
    %v120 = vpop.f32.mrf.mxu0
    %v121 = vadd.f32 %v101, %v120
    %122 = vdwg.mxu0
    %123 = vst [vmem:[#allocation7] sm:$0xff] %v121
    // Predicated region
    $region22: #{tpu_custom_call.1} parent=1 // pred_check
      _
    $region23: #{tpu_custom_call.1} parent=1 // pred_check_branch
      %125 = sbr.rel (0) target = $region25
    $region24: #{tpu_custom_call.1} parent=1 // pred_region
      %127 = vsyncadd [#allocation4], 0
      %s129 = sshll.u32 [#allocation7], 4
      %s130 = int_to_ptr.vmem [resolvable:$true] %s129
      %s131 = sshll.u32 %s3, 4
      %s132 = int_to_ptr.hbm [resolvable:$true] %s131
      %134 = dma.vmem_to_hbm [thread:$0]  %s130, 128, %s132, [#allocation4]
    $region25: #{tpu_custom_call.1} parent=1 // pred_fallthru
      _
    // Predicated region
    $region26: #{tpu_custom_call.1} parent=1 // pred_check
      _
    $region27: #{tpu_custom_call.1} parent=1 // pred_check_branch
      %136 = sbr.rel (0) target = $region29
    $region28: #{tpu_custom_call.1} parent=1 // pred_region
      %138 = dma.done [#allocation4], 128
    $region29: #{tpu_custom_call.1} parent=1 // pred_fallthru
      _
    %139 = vsyncpa [#allocation3], 1
    %140 = vsyncpa [#allocation6], 1
    %141 = vsyncpa [#allocation4], 1

</llo_original>
